<compile_context>
chip_gen: v7x
topology: tpu7x:2x2x1
jax: 0.10.0
libtpu: 0.0.40
codegen_flags: <defaults>
</compile_context>

<pallas_src>
import math

import jax
import jax.numpy as jnp
from jax.experimental import pallas as pl
from jax.experimental.pallas import tpu as pltpu

_LANES = 128
_SUBLANES = 8


def _scale_shift_kernel(x_ref, s_ref, t_ref, z_ref):
    # s/t blocks are tiny constants; exp lands on the EUP slot (free filler
    # next to the VPU multiply-add), so evaluating it per tile costs nothing.
    x = x_ref[...].astype(jnp.float32)
    s = s_ref[...].astype(jnp.float32)
    t = t_ref[...].astype(jnp.float32)
    z_ref[...] = (x * jnp.exp(s) + t).astype(z_ref.dtype)


def _round_up(v, m):
    return ((v + m - 1) // m) * m


def _vmem_budgets():
    """(tile_budget_bytes, vmem_limit_bytes), generation-aware.

    Defaults are safe for v7x (64 MiB physical VMEM per TensorCore); on the
    128 MiB parts (v5e/v6e) we allow bigger tiles / fewer grid steps.
    """
    tile_budget = 24 * 1024 * 1024
    vmem_limit = 48 * 1024 * 1024
    try:
        cap = int(pltpu.get_tpu_info().vmem_capacity_bytes)
        if cap >= 128 * 1024 * 1024:
            tile_budget = 48 * 1024 * 1024
            vmem_limit = 64 * 1024 * 1024
    except Exception:
        pass  # unknown chip: keep the conservative (v7x-safe) numbers
    return tile_budget, vmem_limit


def _lane_dense_view(x, s, t):
    """Present x/s/t so the kernel's trailing dims fully occupy (8,128) vregs.

    Returns (x_view, s_view, t_view, leading_align) where leading_align is the
    alignment required on the tiled leading axis (8 when that axis is the
    sublane axis, 1 when the view is 3-D and its trailing dims are already
    (8,128)-dense).  The reshapes are free row-major views of contiguous data;
    only the tiny (1, dim) parameters get materialized as slabs.
    """
    B, dim = x.shape
    if dim % _LANES == 0:
        return x, s, t, _SUBLANES                       # already lane-dense
    n = B * dim
    if n % _LANES != 0:
        # Cannot flatten to 128-wide rows: natural layout (lane-padded tiles +
        # masked stores; still correct, just not the fast path).
        return x, s, t, _SUBLANES
    rows = n // _LANES
    period = dim // math.gcd(dim, _LANES)               # s/t period in flat rows
    if period == 1:                                     # dim divides 128
        rep = _LANES // dim
        return (x.reshape(rows, _LANES),
                jnp.tile(s, (1, rep)), jnp.tile(t, (1, rep)),
                _SUBLANES)
    # General awkward dim (e.g. 96, 192): period rounded up to whole sublanes
    # so the (P8, 128) trailing dims stay vreg-dense and unmasked.
    p8 = period * _SUBLANES // math.gcd(period, _SUBLANES)   # lcm(period, 8)
    if rows % p8 != 0:
        # Ragged vs. the sublane-aligned period: keep the natural layout.
        return x, s, t, _SUBLANES
    rep = (p8 * _LANES) // dim
    s_slab = jnp.tile(s, (1, rep)).reshape(1, p8, _LANES)
    t_slab = jnp.tile(t, (1, rep)).reshape(1, p8, _LANES)
    return x.reshape(rows // p8, p8, _LANES), s_slab, t_slab, 1


def _pick_leading_tile(n_lead, bytes_per_lead, budget_bytes, align):
    """Largest aligned leading tile whose double-buffered x+z tiles fit the
    VMEM budget, capped so the grid has >= 2 steps whenever the array is
    splittable (lets "parallel" shard the stream across both v7x TensorCores).
    """
    # 2 pipeline buffers x (x tile + z tile) = 4 tiles resident at once.
    max_lead = max(int(budget_bytes // (4 * bytes_per_lead)), 1)
    if max_lead >= n_lead:
        if n_lead <= align:
            return n_lead                                # single full block
        max_lead = _round_up(pl.cdiv(n_lead, 2), align)  # force >= 2 steps
    tb = min(max_lead, n_lead)
    if tb < n_lead:
        tb = max((tb // align) * align, align)           # keep (8,128) blocks
    return min(tb, n_lead)


def affine_constant_flow_forward(x, s, t, *, block_rows=None):
    """Pallas TPU implementation of AffineConstantFlow.forward.

    x: (B, dim); s, t: (1, dim).  Returns (z, log_det) with z of shape
    (B, dim) and log_det of shape (1,) == sum(s, dim=1), matching PyTorch.

    block_rows optionally overrides the leading-axis tile of the internal
    lane-dense view (rounded to the required alignment).
    """
    B, dim = x.shape
    assert s.shape == (1, dim) and t.shape == (1, dim)

    # log_det only depends on the tiny (1, dim) parameter: plain JAX (fused by
    # XLA) instead of an extra kernel dispatch.
    log_det = jnp.sum(s, axis=1)

    x_v, s_v, t_v, align = _lane_dense_view(x, s, t)
    lead = x_v.shape[0]
    trailing = x_v.shape[1:]
    bytes_per_lead = math.prod(trailing) * jnp.dtype(x.dtype).itemsize

    tile_budget, vmem_limit = _vmem_budgets()
    if block_rows is not None:
        tb = min(int(block_rows), lead)
        if tb < lead:
            tb = max((tb // align) * align, align)
    else:
        tb = _pick_leading_tile(lead, bytes_per_lead, tile_budget, align)

    grid = (pl.cdiv(lead, tb),)
    ndim = x_v.ndim
    zeros_tail = (0,) * (ndim - 1)
    x_block = (tb,) + trailing
    x_map = lambda i: (i,) + zeros_tail
    const_map = lambda i: (0,) * ndim

    z_v = pl.pallas_call(
        _scale_shift_kernel,
        out_shape=jax.ShapeDtypeStruct(x_v.shape, x.dtype),
        grid_spec=pltpu.PrefetchScalarGridSpec(
            num_scalar_prefetch=0,
            grid=grid,
            in_specs=[
                pl.BlockSpec(x_block, x_map),        # x tile (streamed)
                pl.BlockSpec(s_v.shape, const_map),  # s (constant block)
                pl.BlockSpec(t_v.shape, const_map),  # t (constant block)
            ],
            out_specs=pl.BlockSpec(x_block, x_map),
        ),
        compiler_params=pltpu.CompilerParams(
            dimension_semantics=("parallel",),   # megacore-shard the stream
            vmem_limit_bytes=vmem_limit,
        ),
    )(x_v, s_v, t_v)

    return z_v.reshape(B, dim), log_det


if __name__ == "__main__":
    def _check(batch, dim, seed, block_rows=None):
        kx, ks, kt = jax.random.split(jax.random.PRNGKey(seed), 3)
        x = jax.random.normal(kx, (batch, dim), dtype=jnp.float32)
        # Deterministic "learned" parameters (nn.Parameter(torch.randn(1, dim)))
        s = jax.random.normal(ks, (1, dim), dtype=jnp.float32)
        t = jax.random.normal(kt, (1, dim), dtype=jnp.float32)
        z, log_det = affine_constant_flow_forward(x, s, t, block_rows=block_rows)
        jax.block_until_ready((z, log_det))
        assert z.shape == (batch, dim) and log_det.shape == (1,)
        assert jnp.allclose(z, x * jnp.exp(s) + t, atol=1e-5, rtol=1e-5)
        assert jnp.allclose(log_det, jnp.sum(s, axis=1), atol=1e-5, rtol=1e-5)

    # dim | 128: 2-D lane-dense view, single full block (typical module size).
    _check(batch=8, dim=32, seed=0)
    # dim % 128 == 0: natural layout; auto tile picker -> 2 "parallel" steps.
    _check(batch=64, dim=256, seed=1)
    # Awkward dim (192 = 1.5 * 128): 3-D lane-dense view (P8 = 24), 2 steps.
    _check(batch=64, dim=192, seed=2)
    # Non-flattenable shape: natural-layout fallback (masked stores, correct).
    _check(batch=7, dim=100, seed=3)
    # User-supplied tile override on the batch-tiled path (grid of 4 steps).
    _check(batch=64, dim=256, seed=4, block_rows=16)

    print("KERNEL_OK")
</pallas_src>

<mosaic_0001>
module attributes {stable_mosaic.version = 11 : i64} {
  func.func @_scale_shift_kernel(%arg0: i32, %arg1: memref<2x128xf32, #tpu.memory_space<vmem>>, %arg2: memref<1x128xf32, #tpu.memory_space<vmem>>, %arg3: memref<1x128xf32, #tpu.memory_space<vmem>>, %arg4: memref<2x128xf32, #tpu.memory_space<vmem>>) attributes {dimension_semantics = [#tpu.dimension_semantics<parallel>], iteration_bounds = array<i64: 1>, scalar_prefetch = 0 : i64, scratch_operands = 0 : i64, tpu.core_type = #tpu.core_type<tc>, window_params = [{transform_indices = @transform_0, window_bounds = array<i64: 2, 128>}, {pipeline_mode = #tpu.pipeline_mode<synchronous>, transform_indices = @transform_1, window_bounds = array<i64: 1, 128>}, {pipeline_mode = #tpu.pipeline_mode<synchronous>, transform_indices = @transform_2, window_bounds = array<i64: 1, 128>}, {transform_indices = @transform_3, window_bounds = array<i64: 2, 128>}]} {
    %c0 = arith.constant 0 : index
    %c0_0 = arith.constant 0 : index
    %0 = vector.load %arg1[%c0, %c0_0] : memref<2x128xf32, #tpu.memory_space<vmem>>, vector<2x128xf32>
    %c0_1 = arith.constant 0 : index
    %c0_2 = arith.constant 0 : index
    %1 = vector.load %arg2[%c0_1, %c0_2] : memref<1x128xf32, #tpu.memory_space<vmem>>, vector<1x128xf32>
    %c0_3 = arith.constant 0 : index
    %c0_4 = arith.constant 0 : index
    %2 = vector.load %arg3[%c0_3, %c0_4] : memref<1x128xf32, #tpu.memory_space<vmem>>, vector<1x128xf32>
    %3 = math.exp %1 : vector<1x128xf32>
    %4 = vector.broadcast %3 : vector<1x128xf32> to vector<2x128xf32>
    %5 = arith.mulf %0, %4 : vector<2x128xf32>
    %6 = vector.broadcast %2 : vector<1x128xf32> to vector<2x128xf32>
    %7 = arith.addf %5, %6 : vector<2x128xf32>
    %c0_5 = arith.constant 0 : index
    %c0_6 = arith.constant 0 : index
    %8 = vector.load %arg4[%c0_5, %c0_6] : memref<2x128xf32, #tpu.memory_space<vmem>>, vector<2x128xf32>
    tpu.vector_store %arg4[%c0_5, %c0_6], %7 {strides = array<i32>} : memref<2x128xf32, #tpu.memory_space<vmem>>, vector<2x128xf32>,
    return
  }
  func.func @transform_0(%arg0: i32) -> (i32, i32) {
    %c0_i32 = arith.constant 0 : i32
    %c0_i32_0 = arith.constant 0 : i32
    return %arg0, %c0_i32 : i32, i32
  }
  func.func @transform_1(%arg0: i32) -> (i32, i32) {
    %c0_i32 = arith.constant 0 : i32
    %c0_i32_0 = arith.constant 0 : i32
    %c0_i32_1 = arith.constant 0 : i32
    return %c0_i32, %c0_i32_0 : i32, i32
  }
  func.func @transform_2(%arg0: i32) -> (i32, i32) {
    %c0_i32 = arith.constant 0 : i32
    %c0_i32_0 = arith.constant 0 : i32
    %c0_i32_1 = arith.constant 0 : i32
    return %c0_i32, %c0_i32_0 : i32, i32
  }
  func.func @transform_3(%arg0: i32) -> (i32, i32) {
    %c0_i32 = arith.constant 0 : i32
    %c0_i32_0 = arith.constant 0 : i32
    return %arg0, %c0_i32 : i32, i32
  }
}

</mosaic_0001>

<llo_original>
// kernel: tpu_custom_call.1
$region0: #{tpu_custom_call.1}
  #allocation0 [shape = 'u32[]', space=smem, size = 0x4, offset = 0x4, fixed_abs, tag = 'smem constant byte address 0x4 - core index']
  #allocation1 [shape = 'u32[144,128]{1,0:T(1,128)}', space=vmem, size = 0x12000, scoped, tag = 'internal scratch']
  %s0 = inlined_call_operand.hbm [shape: f32[2,128], index: 0, kind: input, shape index: {}]
  %s1 = inlined_call_operand.vmem [shape: f32[1,128], index: 1, kind: input, shape index: {}]
  %s2 = inlined_call_operand.vmem [shape: f32[1,128], index: 2, kind: input, shape index: {}]
  %s3 = inlined_call_operand.hbm [shape: f32[2,128], index: 3, kind: output, shape index: {}]
  %s4 = sld [smem:[#allocation0]]
  $region26: #{tpu_custom_call.1} parent=0
    _
  %s6 = ssub.s32 1, %s4
  %s7 = scalar_select 0, %s6, %s4
  $region1: #{tpu_custom_call.1} parent=0
    #allocation2 [shape = 'u8[1024]{0}', space=vmem, size = 0x400, scoped, tag = 'input window, operand 0, single buffered']
    #allocation3 [shape = 's32[1]{0}', space=sflag, size = 0x4, scoped, tag = 'scoped memory for tpu_custom_call.1']
    #allocation4 [shape = 's32[1]{0}', space=sflag, size = 0x4, scoped, tag = 'scoped memory for tpu_custom_call.1']
    #allocation5 [shape = 'u8[1024]{0}', space=vmem, size = 0x400, scoped, tag = 'output window, operand 0, single buffered']
    %8 = vsyncpa [#allocation3], 0
    %9 = vsyncpa [#allocation4], 0
    // Predicated region
    $region2: #{tpu_custom_call.1} parent=1 // pred_check
      _
    $region3: #{tpu_custom_call.1} parent=1 // pred_check_branch
      %11 = sbr.rel (0) target = $region5
    $region4: #{tpu_custom_call.1} parent=1 // pred_region
      %s13 = ssub.s32 32, 32
      %14 = vsyncadd [#allocation3], %s13
      %s16 = sshll.u32 [#allocation2], 4
      %s17 = int_to_ptr.vmem [resolvable:$true] %s16
      %19 = dma.hbm_to_vmem [thread:$0]  %s0, 32, %s17, [#allocation3]
    $region5: #{tpu_custom_call.1} parent=1 // pred_fallthru
      _
    // Predicated region
    $region6: #{tpu_custom_call.1} parent=1 // pred_check
      _
    $region7: #{tpu_custom_call.1} parent=1 // pred_check_branch
      %21 = sbr.rel (0) target = $region9
    $region8: #{tpu_custom_call.1} parent=1 // pred_region
      _
    $region9: #{tpu_custom_call.1} parent=1 // pred_fallthru
      _
    // Predicated region
    $region10: #{tpu_custom_call.1} parent=1 // pred_check
      _
    $region11: #{tpu_custom_call.1} parent=1 // pred_check_branch
      %23 = sbr.rel (0) target = $region13
    $region12: #{tpu_custom_call.1} parent=1 // pred_region
      _
    $region13: #{tpu_custom_call.1} parent=1 // pred_fallthru
      _
    // Predicated region
    $region14: #{tpu_custom_call.1} parent=1 // pred_check
      _
    $region15: #{tpu_custom_call.1} parent=1 // pred_check_branch
      %25 = sbr.rel (0) target = $region17
    $region16: #{tpu_custom_call.1} parent=1 // pred_region
      %26 = dma.done [#allocation3], 32
    $region17: #{tpu_custom_call.1} parent=1 // pred_fallthru
      _
    %v27 = vld [vmem:[#allocation2] sm:$0x3]
    %v28 = vld [vmem:[%s1] sm:$0x1]
    %v29 = vld [vmem:[%s2] sm:$0x1]
    %v30 = vmul.f32 %v28, 1.442695
    %v31 = vpow.pop %v30
    %v33 = vlaneseq
    %v34 = vshrl.u32 %v33, 7
    %v35 = vsub.s32 0, %v34
    %v36 = vrot.slane %v31, %v35
    %v38 = vmul.f32 %v27, %v36
    %v40 = vlaneseq
    %v41 = vshrl.u32 %v40, 7
    %v42 = vsub.s32 0, %v41
    %v43 = vrot.slane %v29, %v42
    %v45 = vadd.f32 %v38, %v43
    %46 = vst [vmem:[#allocation5] sm:$0x3] %v45
    // Predicated region
    $region18: #{tpu_custom_call.1} parent=1 // pred_check
      _
    $region19: #{tpu_custom_call.1} parent=1 // pred_check_branch
      %48 = sbr.rel (0) target = $region21
    $region20: #{tpu_custom_call.1} parent=1 // pred_region
      %s50 = ssub.s32 32, 32
      %51 = vsyncadd [#allocation4], %s50
      %s53 = sshll.u32 [#allocation5], 4
      %s54 = int_to_ptr.vmem [resolvable:$true] %s53
      %56 = dma.vmem_to_hbm [thread:$0]  %s54, 32, %s3, [#allocation4]
    $region21: #{tpu_custom_call.1} parent=1 // pred_fallthru
      _
    // Predicated region
    $region22: #{tpu_custom_call.1} parent=1 // pred_check
      _
    $region23: #{tpu_custom_call.1} parent=1 // pred_check_branch
      %58 = sbr.rel (0) target = $region25
    $region24: #{tpu_custom_call.1} parent=1 // pred_region
      %59 = dma.done [#allocation4], 32
    $region25: #{tpu_custom_call.1} parent=1 // pred_fallthru
      _
    %60 = vsyncpa [#allocation3], 1
    %61 = vsyncpa [#allocation4], 1

</llo_original>
